<compile_context>
chip_gen: v7x
topology: tpu7x:2x2x1
jax: 0.10.0
libtpu: 0.0.40
codegen_flags: <defaults>
</compile_context>

<pallas_src>
from functools import partial

import jax
import jax.numpy as jnp
from jax.experimental import pallas as pl
from jax.experimental.pallas import tpu as pltpu

_LANE = 128         # vreg lane width
_BATCH_ALIGN = 16   # bf16 output tile needs sublane multiples of 16
_BN_EPS = 1e-5      # PyTorch BatchNorm1d default
_MIN_SPLIT_B = 256  # batches >= this always get >= 2 grid steps (v7x megacore)


def _cdiv(a, b):
    return -(-a // b)


def _round_up(n, m):
    return _cdiv(n, m) * m


def _mlp_kernel(x_ref,
                w1_ref, b1_ref,
                w2_ref, b2_ref,
                w3_ref, b3_ref,
                wo_ref, bo_ref,
                o_ref):
    """Fused 4-layer MLP (BatchNorm pre-folded into W/b), eval mode.

    Matmuls use bf16 inputs with f32 accumulation on the MXU; bias add and
    ReLU run in f32 on the VPU. The f32->bf16 input cast happens here (hidden
    under MXU work) and the result is stored as bf16 into dense 128-lane tiles.
    """
    x = x_ref[...].astype(jnp.bfloat16)              # in-kernel cast (VPU)

    # layer_1 (+ folded batchnorm1) -> relu
    h = jnp.dot(x, w1_ref[...], preferred_element_type=jnp.float32) + b1_ref[...]
    h = jnp.maximum(h, 0.0).astype(jnp.bfloat16)

    # layer_2 (+ folded batchnorm2) -> relu -> dropout (identity at eval)
    h = jnp.dot(h, w2_ref[...], preferred_element_type=jnp.float32) + b2_ref[...]
    h = jnp.maximum(h, 0.0).astype(jnp.bfloat16)

    # layer_3 (+ folded batchnorm3, out dim zero-padded 64->128) -> relu -> dropout
    h = jnp.dot(h, w3_ref[...], preferred_element_type=jnp.float32) + b3_ref[...]
    h = jnp.maximum(h, 0.0).astype(jnp.bfloat16)

    # layer_out (output lanes zero-padded to 128 -> dense bf16 stores)
    out = jnp.dot(h, wo_ref[...], preferred_element_type=jnp.float32) + bo_ref[...]
    o_ref[...] = out.astype(o_ref.dtype)


def prepare_params(params):
    """Fold BN into W/b, cast matmul operands to bf16, pad lane dims.

    Call ONCE (hoisted out of the per-forward path); the returned operand
    tuple is reused by every neural_classifier_forward call.
    """
    def fold(n, pad_out_to=None):
        scale = params[f"g{n}"] / jnp.sqrt(params[f"v{n}"] + _BN_EPS)
        w = params[f"w{n}"] * scale[None, :]
        b = (params[f"b{n}"] - params[f"m{n}"]) * scale + params[f"be{n}"]
        if pad_out_to is not None and pad_out_to > w.shape[1]:
            pad = pad_out_to - w.shape[1]
            w = jnp.pad(w, ((0, 0), (0, pad)))       # zero cols -> relu(0) = 0
            b = jnp.pad(b, (0, pad))
        return w.astype(jnp.bfloat16), b.reshape(1, -1).astype(jnp.float32)

    w1, b1 = fold("1")
    w2, b2 = fold("2")
    w3, b3 = fold("3", pad_out_to=_LANE)             # 64 -> 128: lane-dense h3

    num_class = params["wo"].shape[1]
    n_pad = _round_up(num_class, _LANE)
    k_out = w3.shape[1]                              # 128 (padded K for layer_out)
    wo = jnp.zeros((k_out, n_pad), jnp.float32)
    wo = wo.at[:params["wo"].shape[0], :num_class].set(params["wo"])
    wo = wo.astype(jnp.bfloat16)
    bo = jnp.zeros((1, n_pad), jnp.float32).at[:, :num_class].set(params["bo"])

    ops = (w1, b1, w2, b2, w3, b3, wo, bo)
    return jax.block_until_ready(ops), num_class


def _vmem_bytes_estimate(block_b, num_feature, n_pad):
    """Rough per-grid-step VMEM footprint (double-buffered I/O + weights +
    live f32/bf16 intermediates)."""
    x_io = 2 * block_b * num_feature * 4
    o_io = 2 * block_b * n_pad * 2
    w = 2 * 2 * (num_feature * 512 + 512 * 128 + 128 * 128 + 128 * n_pad)
    act = block_b * (512 + 128 + 128 + n_pad) * 6
    return x_io + o_io + w + act


@partial(jax.jit, static_argnames=("num_class", "block_b"))
def neural_classifier_forward(x, ops, *, num_class, block_b=1024):
    """Runs the fused MLP kernel, tiling over the (parallel) batch axis.

    Tiles are balanced (batch padding < 16 rows) and batches >= _MIN_SPLIT_B
    rows always produce >= 2 grid steps so both v7x TensorCores get work.
    """
    B, F = x.shape
    w1, b1, w2, b2, w3, b3, wo, bo = ops
    n_pad = wo.shape[1]

    num_steps = max(1, _cdiv(B, block_b))
    if num_steps == 1 and B >= _MIN_SPLIT_B:
        num_steps = 2                                 # v7x: keep both TCs busy
    block_b_eff = _round_up(_cdiv(B, num_steps), _BATCH_ALIGN)
    B_pad = block_b_eff * num_steps
    if B_pad != B:                                    # skip the pad when aligned
        x = jnp.pad(x, ((0, B_pad - B), (0, 0)))

    operands = (x, w1, b1, w2, b2, w3, b3, wo, bo)

    # Weights/biases use constant index maps -> fetched once, resident in VMEM
    # across the batch grid (~230 KB bf16 total).
    full = lambda arr: pl.BlockSpec(arr.shape, lambda i: (0, 0))
    in_specs = [pl.BlockSpec((block_b_eff, F), lambda i: (i, 0))]
    in_specs += [full(op) for op in operands[1:]]

    # Raise the scoped VMEM limit only when the per-step footprint would blow
    # past v5e's 16 MiB default (block_b pushed to ~2048+).
    compiler_kwargs = dict(dimension_semantics=("parallel",))
    vmem_est = _vmem_bytes_estimate(block_b_eff, F, n_pad)
    if vmem_est > 12 * 1024 * 1024:
        compiler_kwargs["vmem_limit_bytes"] = min(int(1.5 * vmem_est),
                                                  48 * 1024 * 1024)

    out = pl.pallas_call(
        _mlp_kernel,
        out_shape=jax.ShapeDtypeStruct((B_pad, n_pad), jnp.bfloat16),
        grid_spec=pltpu.PrefetchScalarGridSpec(
            num_scalar_prefetch=0,
            grid=(num_steps,),
            in_specs=in_specs,
            out_specs=pl.BlockSpec((block_b_eff, n_pad), lambda i: (i, 0)),
        ),
        compiler_params=pltpu.CompilerParams(**compiler_kwargs),
    )(*operands)

    # Slice off batch/lane padding; return f32 logits (PyTorch semantics).
    return out[:B, :num_class].astype(jnp.float32)


def init_params(key, num_feature, num_class):
    """Deterministic synthetic parameters matching NeuralClassifier's shapes."""
    dims = [(num_feature, 512), (512, 128), (128, 64), (64, num_class)]
    names = ["1", "2", "3", "o"]
    params = {}
    keys = jax.random.split(key, 16)
    ki = 0
    for (d_in, d_out), n in zip(dims, names):
        params[f"w{n}"] = (jax.random.normal(keys[ki], (d_in, d_out), jnp.float32)
                           * (1.0 / jnp.sqrt(d_in)))
        params[f"b{n}"] = (jax.random.normal(keys[ki + 1], (d_out,), jnp.float32)
                           * 0.01)
        ki += 2
    # BatchNorm1d params for the 512/128/64 layers
    for n, c in zip(["1", "2", "3"], [512, 128, 64]):
        params[f"g{n}"] = 1.0 + 0.1 * jax.random.normal(keys[ki], (c,), jnp.float32)
        params[f"be{n}"] = 0.05 * jax.random.normal(keys[ki + 1], (c,), jnp.float32)
        params[f"m{n}"] = 0.1 * jnp.sin(jnp.arange(c, dtype=jnp.float32))
        params[f"v{n}"] = 1.0 + 0.1 * jnp.cos(jnp.arange(c, dtype=jnp.float32)) ** 2
        ki += 2
    return params


def reference_forward(x, params):
    """Pure-JAX f32 reference (eval-mode PyTorch semantics)."""
    def bn(h, n):
        scale = params[f"g{n}"] / jnp.sqrt(params[f"v{n}"] + _BN_EPS)
        return (h - params[f"m{n}"]) * scale + params[f"be{n}"]

    h = x @ params["w1"] + params["b1"]
    h = jnp.maximum(bn(h, "1"), 0.0)
    h = h @ params["w2"] + params["b2"]
    h = jnp.maximum(bn(h, "2"), 0.0)
    h = h @ params["w3"] + params["b3"]
    h = jnp.maximum(bn(h, "3"), 0.0)
    return h @ params["wo"] + params["bo"]


def reference_forward_matched(x, ops, num_class):
    """Pure-JAX reference matching the kernel's numerics (bf16 MXU inputs,
    f32 accumulation, bf16 output store)."""
    w1, b1, w2, b2, w3, b3, wo, bo = ops
    h = x.astype(jnp.bfloat16)
    h = jnp.maximum(jnp.dot(h, w1, preferred_element_type=jnp.float32) + b1,
                    0.0).astype(jnp.bfloat16)
    h = jnp.maximum(jnp.dot(h, w2, preferred_element_type=jnp.float32) + b2,
                    0.0).astype(jnp.bfloat16)
    h = jnp.maximum(jnp.dot(h, w3, preferred_element_type=jnp.float32) + b3,
                    0.0).astype(jnp.bfloat16)
    out = (jnp.dot(h, wo, preferred_element_type=jnp.float32) + bo
           ).astype(jnp.bfloat16)
    return out[:, :num_class].astype(jnp.float32)


if __name__ == "__main__":
    num_feature = 32
    num_class = 8
    batch = 16

    key = jax.random.PRNGKey(0)
    k_params, k_x = jax.random.split(key)
    params = init_params(k_params, num_feature, num_class)
    x = jax.random.normal(k_x, (batch, num_feature), jnp.float32)

    # One-time prep (BN fold, bf16 cast, lane padding) hoisted out of the
    # per-call path.
    ops, n_class = prepare_params(params)

    out = neural_classifier_forward(x, ops, num_class=n_class)
    out = jax.block_until_ready(out)
    assert out.shape == (batch, num_class)

    # Tight check against a reference with identical numerics (bf16/f32 mix,
    # bf16 output rounding).
    ref_matched = reference_forward_matched(x, ops, n_class)
    assert jnp.allclose(out, ref_matched, atol=1e-2, rtol=1e-2), \
        "mismatch vs bf16-matched reference"

    # Loose check against the full-f32 PyTorch-semantics reference (bf16
    # matmul inputs / bf16 output store differ at the ~1e-2 level by design).
    ref_f32 = reference_forward(x, params)
    assert jnp.allclose(out, ref_f32, atol=1e-1, rtol=1e-1), \
        "mismatch vs f32 reference"

    # Exercise the multi-step / non-aligned-batch path (balanced tiles,
    # padding sliced off, 2-step parallel grid).
    x_big = jax.random.normal(jax.random.PRNGKey(1), (300, num_feature),
                              jnp.float32)
    out_big = jax.block_until_ready(
        neural_classifier_forward(x_big, ops, num_class=n_class))
    assert out_big.shape == (300, num_class)
    ref_big = reference_forward_matched(x_big, ops, n_class)
    assert jnp.allclose(out_big, ref_big, atol=1e-2, rtol=1e-2), \
        "mismatch on multi-step grid"

    print("KERNEL_OK")
</pallas_src>

<mosaic_0001>
module attributes {stable_mosaic.version = 11 : i64} {
  func.func @_mlp_kernel(%arg0: i32, %arg1: memref<16x32xf32, #tpu.memory_space<vmem>>, %arg2: memref<32x512xbf16, #tpu.memory_space<vmem>>, %arg3: memref<1x512xf32, #tpu.memory_space<vmem>>, %arg4: memref<512x128xbf16, #tpu.memory_space<vmem>>, %arg5: memref<1x128xf32, #tpu.memory_space<vmem>>, %arg6: memref<128x128xbf16, #tpu.memory_space<vmem>>, %arg7: memref<1x128xf32, #tpu.memory_space<vmem>>, %arg8: memref<128x128xbf16, #tpu.memory_space<vmem>>, %arg9: memref<1x128xf32, #tpu.memory_space<vmem>>, %arg10: memref<16x128xbf16, #tpu.memory_space<vmem>>) attributes {dimension_semantics = [#tpu.dimension_semantics<parallel>], iteration_bounds = array<i64: 1>, scalar_prefetch = 0 : i64, scratch_operands = 0 : i64, tpu.core_type = #tpu.core_type<tc>, window_params = [{transform_indices = @transform_0, window_bounds = array<i64: 16, 32>}, {pipeline_mode = #tpu.pipeline_mode<synchronous>, transform_indices = @transform_1, window_bounds = array<i64: 32, 512>}, {pipeline_mode = #tpu.pipeline_mode<synchronous>, transform_indices = @transform_2, window_bounds = array<i64: 1, 512>}, {pipeline_mode = #tpu.pipeline_mode<synchronous>, transform_indices = @transform_3, window_bounds = array<i64: 512, 128>}, {pipeline_mode = #tpu.pipeline_mode<synchronous>, transform_indices = @transform_4, window_bounds = array<i64: 1, 128>}, {pipeline_mode = #tpu.pipeline_mode<synchronous>, transform_indices = @transform_5, window_bounds = array<i64: 128, 128>}, {pipeline_mode = #tpu.pipeline_mode<synchronous>, transform_indices = @transform_6, window_bounds = array<i64: 1, 128>}, {pipeline_mode = #tpu.pipeline_mode<synchronous>, transform_indices = @transform_7, window_bounds = array<i64: 128, 128>}, {pipeline_mode = #tpu.pipeline_mode<synchronous>, transform_indices = @transform_8, window_bounds = array<i64: 1, 128>}, {transform_indices = @transform_9, window_bounds = array<i64: 16, 128>}]} {
    %c0 = arith.constant 0 : index
    %c0_0 = arith.constant 0 : index
    %0 = vector.load %arg1[%c0, %c0_0] : memref<16x32xf32, #tpu.memory_space<vmem>>, vector<16x32xf32>
    %1 = arith.truncf %0 : vector<16x32xf32> to vector<16x32xbf16>
    %c0_1 = arith.constant 0 : index
    %c0_2 = arith.constant 0 : index
    %2 = vector.load %arg2[%c0_1, %c0_2] : memref<32x512xbf16, #tpu.memory_space<vmem>>, vector<32x512xbf16>
    %cst = arith.constant dense<0.000000e+00> : vector<16x512xf32>
    %3 = tpu.matmul %1, %2, %cst {dimension_numbers = #tpu.dot_dimension_numbers<[1], [0], [0], [1], [0, 0, 1, 1], [], []>} : vector<16x32xbf16>, vector<32x512xbf16>, vector<16x512xf32> -> vector<16x512xf32>
    %c0_3 = arith.constant 0 : index
    %c0_4 = arith.constant 0 : index
    %4 = vector.load %arg3[%c0_3, %c0_4] : memref<1x512xf32, #tpu.memory_space<vmem>>, vector<1x512xf32>
    %5 = vector.broadcast %4 : vector<1x512xf32> to vector<16x512xf32>
    %6 = arith.addf %3, %5 : vector<16x512xf32>
    %cst_5 = arith.constant 0.000000e+00 : f32
    %7 = vector.broadcast %cst_5 : f32 to vector<16x512xf32>
    %8 = arith.maximumf %6, %7 : vector<16x512xf32>
    %9 = arith.truncf %8 : vector<16x512xf32> to vector<16x512xbf16>
    %c0_6 = arith.constant 0 : index
    %c0_7 = arith.constant 0 : index
    %10 = vector.load %arg4[%c0_6, %c0_7] : memref<512x128xbf16, #tpu.memory_space<vmem>>, vector<512x128xbf16>
    %cst_8 = arith.constant dense<0.000000e+00> : vector<16x128xf32>
    %11 = tpu.matmul %9, %10, %cst_8 {dimension_numbers = #tpu.dot_dimension_numbers<[1], [0], [0], [1], [0, 0, 1, 1], [], []>} : vector<16x512xbf16>, vector<512x128xbf16>, vector<16x128xf32> -> vector<16x128xf32>
    %c0_9 = arith.constant 0 : index
    %c0_10 = arith.constant 0 : index
    %12 = vector.load %arg5[%c0_9, %c0_10] : memref<1x128xf32, #tpu.memory_space<vmem>>, vector<1x128xf32>
    %13 = vector.broadcast %12 : vector<1x128xf32> to vector<16x128xf32>
    %14 = arith.addf %11, %13 : vector<16x128xf32>
    %cst_11 = arith.constant 0.000000e+00 : f32
    %15 = vector.broadcast %cst_11 : f32 to vector<16x128xf32>
    %16 = arith.maximumf %14, %15 : vector<16x128xf32>
    %17 = arith.truncf %16 : vector<16x128xf32> to vector<16x128xbf16>
    %c0_12 = arith.constant 0 : index
    %c0_13 = arith.constant 0 : index
    %18 = vector.load %arg6[%c0_12, %c0_13] : memref<128x128xbf16, #tpu.memory_space<vmem>>, vector<128x128xbf16>
    %cst_14 = arith.constant dense<0.000000e+00> : vector<16x128xf32>
    %19 = tpu.matmul %17, %18, %cst_14 {dimension_numbers = #tpu.dot_dimension_numbers<[1], [0], [0], [1], [0, 0, 1, 1], [], []>} : vector<16x128xbf16>, vector<128x128xbf16>, vector<16x128xf32> -> vector<16x128xf32>
    %c0_15 = arith.constant 0 : index
    %c0_16 = arith.constant 0 : index
    %20 = vector.load %arg7[%c0_15, %c0_16] : memref<1x128xf32, #tpu.memory_space<vmem>>, vector<1x128xf32>
    %21 = vector.broadcast %20 : vector<1x128xf32> to vector<16x128xf32>
    %22 = arith.addf %19, %21 : vector<16x128xf32>
    %cst_17 = arith.constant 0.000000e+00 : f32
    %23 = vector.broadcast %cst_17 : f32 to vector<16x128xf32>
    %24 = arith.maximumf %22, %23 : vector<16x128xf32>
    %25 = arith.truncf %24 : vector<16x128xf32> to vector<16x128xbf16>
    %c0_18 = arith.constant 0 : index
    %c0_19 = arith.constant 0 : index
    %26 = vector.load %arg8[%c0_18, %c0_19] : memref<128x128xbf16, #tpu.memory_space<vmem>>, vector<128x128xbf16>
    %cst_20 = arith.constant dense<0.000000e+00> : vector<16x128xf32>
    %27 = tpu.matmul %25, %26, %cst_20 {dimension_numbers = #tpu.dot_dimension_numbers<[1], [0], [0], [1], [0, 0, 1, 1], [], []>} : vector<16x128xbf16>, vector<128x128xbf16>, vector<16x128xf32> -> vector<16x128xf32>
    %c0_21 = arith.constant 0 : index
    %c0_22 = arith.constant 0 : index
    %28 = vector.load %arg9[%c0_21, %c0_22] : memref<1x128xf32, #tpu.memory_space<vmem>>, vector<1x128xf32>
    %29 = vector.broadcast %28 : vector<1x128xf32> to vector<16x128xf32>
    %30 = arith.addf %27, %29 : vector<16x128xf32>
    %31 = arith.truncf %30 : vector<16x128xf32> to vector<16x128xbf16>
    %c0_23 = arith.constant 0 : index
    %c0_24 = arith.constant 0 : index
    %32 = vector.load %arg10[%c0_23, %c0_24] : memref<16x128xbf16, #tpu.memory_space<vmem>>, vector<16x128xbf16>
    tpu.vector_store %arg10[%c0_23, %c0_24], %31 {strides = array<i32>} : memref<16x128xbf16, #tpu.memory_space<vmem>>, vector<16x128xbf16>,
    return
  }
  func.func @transform_0(%arg0: i32) -> (i32, i32) {
    %c0_i32 = arith.constant 0 : i32
    %c0_i32_0 = arith.constant 0 : i32
    return %arg0, %c0_i32 : i32, i32
  }
  func.func @transform_1(%arg0: i32) -> (i32, i32) {
    %c0_i32 = arith.constant 0 : i32
    %c0_i32_0 = arith.constant 0 : i32
    %c0_i32_1 = arith.constant 0 : i32
    return %c0_i32, %c0_i32_0 : i32, i32
  }
  func.func @transform_2(%arg0: i32) -> (i32, i32) {
    %c0_i32 = arith.constant 0 : i32
    %c0_i32_0 = arith.constant 0 : i32
    %c0_i32_1 = arith.constant 0 : i32
    return %c0_i32, %c0_i32_0 : i32, i32
  }
  func.func @transform_3(%arg0: i32) -> (i32, i32) {
    %c0_i32 = arith.constant 0 : i32
    %c0_i32_0 = arith.constant 0 : i32
    %c0_i32_1 = arith.constant 0 : i32
    return %c0_i32, %c0_i32_0 : i32, i32
  }
  func.func @transform_4(%arg0: i32) -> (i32, i32) {
    %c0_i32 = arith.constant 0 : i32
    %c0_i32_0 = arith.constant 0 : i32
    %c0_i32_1 = arith.constant 0 : i32
    return %c0_i32, %c0_i32_0 : i32, i32
  }
  func.func @transform_5(%arg0: i32) -> (i32, i32) {
    %c0_i32 = arith.constant 0 : i32
    %c0_i32_0 = arith.constant 0 : i32
    %c0_i32_1 = arith.constant 0 : i32
    return %c0_i32, %c0_i32_0 : i32, i32
  }
  func.func @transform_6(%arg0: i32) -> (i32, i32) {
    %c0_i32 = arith.constant 0 : i32
    %c0_i32_0 = arith.constant 0 : i32
    %c0_i32_1 = arith.constant 0 : i32
    return %c0_i32, %c0_i32_0 : i32, i32
  }
  func.func @transform_7(%arg0: i32) -> (i32, i32) {
    %c0_i32 = arith.constant 0 : i32
    %c0_i32_0 = arith.constant 0 : i32
    %c0_i32_1 = arith.constant 0 : i32
    return %c0_i32, %c0_i32_0 : i32, i32
  }
  func.func @transform_8(%arg0: i32) -> (i32, i32) {
    %c0_i32 = arith.constant 0 : i32
    %c0_i32_0 = arith.constant 0 : i32
    %c0_i32_1 = arith.constant 0 : i32
    return %c0_i32, %c0_i32_0 : i32, i32
  }
  func.func @transform_9(%arg0: i32) -> (i32, i32) {
    %c0_i32 = arith.constant 0 : i32
    %c0_i32_0 = arith.constant 0 : i32
    return %arg0, %c0_i32 : i32, i32
  }
}

</mosaic_0001>

<llo_original>
// kernel: neural_classifier_forward.1
$region0: #{neural_classifier_forward.1}
  #allocation0 [shape = 'u32[]', space=smem, size = 0x4, offset = 0x4, fixed_abs, tag = 'smem constant byte address 0x4 - core index']
  #allocation1 [shape = 'u32[144,128]{1,0:T(1,128)}', space=vmem, size = 0x12000, scoped, tag = 'internal scratch']
  %s0 = inlined_call_operand.hbm [shape: f32[16,32], index: 0, kind: input, shape index: {}]
  %s1 = inlined_call_operand.hbm [shape: bf16[32,512], index: 1, kind: input, shape index: {}]
  %s2 = inlined_call_operand.vmem [shape: f32[1,512], index: 2, kind: input, shape index: {}]
  %s3 = inlined_call_operand.hbm [shape: bf16[512,128], index: 3, kind: input, shape index: {}]
  %s4 = inlined_call_operand.vmem [shape: f32[1,128], index: 4, kind: input, shape index: {}]
  %s5 = inlined_call_operand.hbm [shape: bf16[128,128], index: 5, kind: input, shape index: {}]
  %s6 = inlined_call_operand.vmem [shape: f32[1,128], index: 6, kind: input, shape index: {}]
  %s7 = inlined_call_operand.hbm [shape: bf16[128,128], index: 7, kind: input, shape index: {}]
  %s8 = inlined_call_operand.vmem [shape: f32[1,128], index: 8, kind: input, shape index: {}]
  %s9 = inlined_call_operand.vmem [shape: bf16[16,128], index: 9, kind: output, shape index: {}]
  %s10 = sld [smem:[#allocation0]]
  $region66: #{neural_classifier_forward.1} parent=0
    _
  %s12 = ssub.s32 1, %s10
  %s13 = scalar_select 0, %s12, %s10
  $region1: #{neural_classifier_forward.1} parent=0
    #allocation2 [shape = 'u8[8192]{0}', space=vmem, size = 0x2000, scoped, tag = 'input window, operand 0, single buffered']
    #allocation3 [shape = 's32[1]{0}', space=sflag, size = 0x4, scoped, tag = 'scoped memory for neural_classifier_forward.1']
    #allocation4 [shape = 'u8[32768]{0}', space=vmem, size = 0x8000, scoped, tag = 'input window, operand 1, single buffered']
    #allocation5 [shape = 's32[1]{0}', space=sflag, size = 0x4, scoped, tag = 'scoped memory for neural_classifier_forward.1']
    #allocation6 [shape = 'u8[131072]{0}', space=vmem, size = 0x20000, scoped, tag = 'input window, operand 3, single buffered']
    #allocation7 [shape = 'u8[32768]{0}', space=vmem, size = 0x8000, scoped, tag = 'input window, operand 5, single buffered']
    #allocation8 [shape = 's32[1]{0}', space=sflag, size = 0x4, scoped, tag = 'scoped memory for neural_classifier_forward.1']
    #allocation9 [shape = 'u8[32768]{0}', space=vmem, size = 0x8000, scoped, tag = 'input window, operand 7, single buffered']
    %14 = vsyncpa [#allocation3], 0
    %15 = vsyncpa [#allocation5], 0
    %16 = vsyncpa [#allocation8], 0
    // Predicated region
    $region2: #{neural_classifier_forward.1} parent=1 // pred_check
      _
    $region3: #{neural_classifier_forward.1} parent=1 // pred_check_branch
      %18 = sbr.rel (0) target = $region5
    $region4: #{neural_classifier_forward.1} parent=1 // pred_region
      %s20 = ssub.s32 256, 256
      %21 = vsyncadd [#allocation3], %s20
      %s22 = sshll.u32 [#allocation2], 4
      %s23 = int_to_ptr.vmem [resolvable:$true] %s22
      %28 = dma.hbm_to_vmem [thread:$0]  %s0, 256, %s23, [#allocation3], 128, 128, 8
    $region5: #{neural_classifier_forward.1} parent=1 // pred_fallthru
      _
    // Predicated region
    $region6: #{neural_classifier_forward.1} parent=1 // pred_check
      _
    $region7: #{neural_classifier_forward.1} parent=1 // pred_check_branch
      %30 = sbr.rel (0) target = $region9
    $region8: #{neural_classifier_forward.1} parent=1 // pred_region
      %s32 = ssub.s32 1024, 1024
      %33 = vsyncadd [#allocation5], %s32
      %s34 = sshll.u32 [#allocation4], 4
      %s35 = int_to_ptr.vmem [resolvable:$true] %s34
      %40 = dma.hbm_to_vmem [thread:$0]  %s1, 1024, %s35, [#allocation5], 256, 256, 16
    $region9: #{neural_classifier_forward.1} parent=1 // pred_fallthru
      _
    // Predicated region
    $region10: #{neural_classifier_forward.1} parent=1 // pred_check
      _
    $region11: #{neural_classifier_forward.1} parent=1 // pred_check_branch
      %42 = sbr.rel (0) target = $region13
    $region12: #{neural_classifier_forward.1} parent=1 // pred_region
      _
    $region13: #{neural_classifier_forward.1} parent=1 // pred_fallthru
      _
    // Predicated region
    $region14: #{neural_classifier_forward.1} parent=1 // pred_check
      _
    $region15: #{neural_classifier_forward.1} parent=1 // pred_check_branch
      %44 = sbr.rel (0) target = $region17
    $region16: #{neural_classifier_forward.1} parent=1 // pred_region
      %s46 = ssub.s32 4096, 4096
      %47 = vsyncadd [#allocation5], %s46
      %s48 = sshll.u32 [#allocation6], 4
      %s49 = int_to_ptr.vmem [resolvable:$true] %s48
      %54 = dma.hbm_to_vmem [thread:$0]  %s3, 4096, %s49, [#allocation5], 64, 64, 4
    $region17: #{neural_classifier_forward.1} parent=1 // pred_fallthru
      _
    // Predicated region
    $region18: #{neural_classifier_forward.1} parent=1 // pred_check
      _
    $region19: #{neural_classifier_forward.1} parent=1 // pred_check_branch
      %56 = sbr.rel (0) target = $region21
    $region20: #{neural_classifier_forward.1} parent=1 // pred_region
      _
    $region21: #{neural_classifier_forward.1} parent=1 // pred_fallthru
      _
    // Predicated region
    $region22: #{neural_classifier_forward.1} parent=1 // pred_check
      _
    $region23: #{neural_classifier_forward.1} parent=1 // pred_check_branch
      %58 = sbr.rel (0) target = $region25
    $region24: #{neural_classifier_forward.1} parent=1 // pred_region
      %s60 = ssub.s32 1024, 1024
      %61 = vsyncadd [#allocation8], %s60
      %s62 = sshll.u32 [#allocation7], 4
      %s63 = int_to_ptr.vmem [resolvable:$true] %s62
      %68 = dma.hbm_to_vmem [thread:$0]  %s5, 1024, %s63, [#allocation8], 64, 64, 4
    $region25: #{neural_classifier_forward.1} parent=1 // pred_fallthru
      _
    // Predicated region
    $region26: #{neural_classifier_forward.1} parent=1 // pred_check
      _
    $region27: #{neural_classifier_forward.1} parent=1 // pred_check_branch
      %70 = sbr.rel (0) target = $region29
    $region28: #{neural_classifier_forward.1} parent=1 // pred_region
      _
    $region29: #{neural_classifier_forward.1} parent=1 // pred_fallthru
      _
    // Predicated region
    $region30: #{neural_classifier_forward.1} parent=1 // pred_check
      _
    $region31: #{neural_classifier_forward.1} parent=1 // pred_check_branch
      %72 = sbr.rel (0) target = $region33
    $region32: #{neural_classifier_forward.1} parent=1 // pred_region
      %s74 = ssub.s32 1024, 1024
      %75 = vsyncadd [#allocation8], %s74
      %s76 = sshll.u32 [#allocation9], 4
      %s77 = int_to_ptr.vmem [resolvable:$true] %s76
      %82 = dma.hbm_to_vmem [thread:$0]  %s7, 1024, %s77, [#allocation8], 64, 64, 4
    $region33: #{neural_classifier_forward.1} parent=1 // pred_fallthru
      _
    // Predicated region
    $region34: #{neural_classifier_forward.1} parent=1 // pred_check
      _
    $region35: #{neural_classifier_forward.1} parent=1 // pred_check_branch
      %84 = sbr.rel (0) target = $region37
    $region36: #{neural_classifier_forward.1} parent=1 // pred_region
      _
    $region37: #{neural_classifier_forward.1} parent=1 // pred_fallthru
      _
    // Predicated region
    $region38: #{neural_classifier_forward.1} parent=1 // pred_check
      _
    $region39: #{neural_classifier_forward.1} parent=1 // pred_check_branch
      %86 = sbr.rel (0) target = $region41
    $region40: #{neural_classifier_forward.1} parent=1 // pred_region
      %87 = dma.done [#allocation3], 256
    $region41: #{neural_classifier_forward.1} parent=1 // pred_fallthru
      _
    // Predicated region
    $region42: #{neural_classifier_forward.1} parent=1 // pred_check
      _
    $region43: #{neural_classifier_forward.1} parent=1 // pred_check_branch
      %89 = sbr.rel (0) target = $region45
    $region44: #{neural_classifier_forward.1} parent=1 // pred_region
      %90 = dma.done [#allocation5], 1024
    $region45: #{neural_classifier_forward.1} parent=1 // pred_fallthru
      _
    // Predicated region
    $region46: #{neural_classifier_forward.1} parent=1 // pred_check
      _
    $region47: #{neural_classifier_forward.1} parent=1 // pred_check_branch
      %92 = sbr.rel (0) target = $region49
    $region48: #{neural_classifier_forward.1} parent=1 // pred_region
      %93 = dma.done [#allocation5], 4096
    $region49: #{neural_classifier_forward.1} parent=1 // pred_fallthru
      _
    // Predicated region
    $region50: #{neural_classifier_forward.1} parent=1 // pred_check
      _
    $region51: #{neural_classifier_forward.1} parent=1 // pred_check_branch
      %95 = sbr.rel (0) target = $region53
    $region52: #{neural_classifier_forward.1} parent=1 // pred_region
      %96 = dma.done [#allocation8], 1024
    $region53: #{neural_classifier_forward.1} parent=1 // pred_fallthru
      _
    // Predicated region
    $region54: #{neural_classifier_forward.1} parent=1 // pred_check
      _
    $region55: #{neural_classifier_forward.1} parent=1 // pred_check_branch
      %98 = sbr.rel (0) target = $region57
    $region56: #{neural_classifier_forward.1} parent=1 // pred_region
      %99 = dma.done [#allocation8], 1024
    $region57: #{neural_classifier_forward.1} parent=1 // pred_fallthru
      _
    %v101 = vld [vmem:[#allocation2] sm:$0xff]
    %v102 = vld [vmem:[#allocation2 + $0x8] sm:$0xff]
    %v103 = vpack.c.bf16 %v102, %v101
    %v104 = vld [vmem:[#allocation4] sm:$0xff]
    %v105 = vld [vmem:[#allocation4 + $0x8] sm:$0xff]
    %v106 = vld [vmem:[#allocation4 + $0x10] sm:$0xff]
    %v107 = vld [vmem:[#allocation4 + $0x18] sm:$0xff]
    %v108 = vld [vmem:[#allocation4 + $0x20] sm:$0xff]
    %v109 = vld [vmem:[#allocation4 + $0x28] sm:$0xff]
    %v110 = vld [vmem:[#allocation4 + $0x30] sm:$0xff]
    %v111 = vld [vmem:[#allocation4 + $0x38] sm:$0xff]
    %v112 = vld [vmem:[%s2] sm:$0xf]
    %v114 = vlaneseq
    %v115 = vshrl.u32 %v114, 7
    %v116 = vsub.s32 0, %v115
    %v117 = vrot.slane %v112, %v116
    %v118 = vlaneseq
    %v119 = vshrl.u32 %v118, 7
    %v120 = vsub.s32 1, %v119
    %v121 = vrot.slane %v112, %v120
    %v122 = vlaneseq
    %v123 = vshrl.u32 %v122, 7
    %v124 = vsub.s32 2, %v123
    %v125 = vrot.slane %v112, %v124
    %v126 = vlaneseq
    %v127 = vshrl.u32 %v126, 7
    %v128 = vsub.s32 3, %v127
    %v129 = vrot.slane %v112, %v128
    %v142 = vunpack.c.l.b16 %v104
    %v143 = vunpack.c.h.b16 %v104
    %v144 = vunpack.c.l.b16 %v105
    %v145 = vunpack.c.h.b16 %v105
    %v146 = vunpack.c.l.b16 %v106
    %v147 = vunpack.c.h.b16 %v106
    %v148 = vunpack.c.l.b16 %v107
    %v149 = vunpack.c.h.b16 %v107
    %v150 = vunpack.c.l.b16 %v108
    %v151 = vunpack.c.h.b16 %v108
    %v152 = vunpack.c.l.b16 %v109
    %v153 = vunpack.c.h.b16 %v109
    %v154 = vunpack.c.l.b16 %v110
    %v155 = vunpack.c.h.b16 %v110
    %v156 = vunpack.c.l.b16 %v111
    %v157 = vunpack.c.h.b16 %v111
    %v158 = vpack.c.b16 %v146, %v142
    %v159 = vpack.c.b16 %v147, %v143
    %v160 = vpack.c.b16 %v148, %v144
    %v161 = vpack.c.b16 %v149, %v145
    %v162 = vpack.c.b16 %v154, %v150
    %v163 = vpack.c.b16 %v155, %v151
    %v164 = vpack.c.b16 %v156, %v152
    %v165 = vpack.c.b16 %v157, %v153
    %vm174 = vcmask 261120
    %v176 = vsel %vm174, %v103, 0
    %178 = vmatprep.subr.bf16.mxu0 %v159
    %179 = vmatpush1.bf16.msra.mxu0 %v158
    %180 = vmatprep.subr.bf16.mxu0 %v163
    %181 = vmatpush1.bf16.msra.mxu0 %v162
    %182 = vmatprep.subr.bf16.mxu0 0
    %183 = vmatpush1.bf16.msra.mxu0 0
    %184 = vmatprep.subr.bf16.mxu0 0
    %185 = vmatpush1.bf16.msra.mxu0 0
    %186 = vmatprep.subr.bf16.mxu0 0
    %187 = vmatpush1.bf16.msra.mxu0 0
    %188 = vmatprep.subr.bf16.mxu0 0
    %189 = vmatpush1.bf16.msra.mxu0 0
    %190 = vmatprep.subr.bf16.mxu0 0
    %191 = vmatpush1.bf16.msra.mxu0 0
    %192 = vmatprep.subr.bf16.mxu0 0
    %193 = vmatpush1.bf16.msra.mxu0 0
    %194 = vmatprep.subr.bf16.mxu0 0
    %195 = vmatpush1.bf16.msra.mxu0 0
    %196 = vmatprep.subr.bf16.mxu0 0
    %197 = vmatpush1.bf16.msra.mxu0 0
    %198 = vmatprep.subr.bf16.mxu0 0
    %199 = vmatpush1.bf16.msra.mxu0 0
    %200 = vmatprep.subr.bf16.mxu0 0
    %201 = vmatpush1.bf16.msra.mxu0 0
    %202 = vmatprep.subr.bf16.mxu0 0
    %203 = vmatpush1.bf16.msra.mxu0 0
    %204 = vmatprep.subr.bf16.mxu0 0
    %205 = vmatpush1.bf16.msra.mxu0 0
    %206 = vmatprep.subr.bf16.mxu0 0
    %207 = vmatpush1.bf16.msra.mxu0 0
    %208 = vmatprep.subr.bf16.mxu0 0
    %209 = vmatpush1.bf16.msra.mxu0 0
    %210 = vmatprep.mubr.bf16.mxu0 0
    %211 = vmatmul.mubr.bf16.gmra.mrb[0].mxu0 %v176
    %v212 = vpop.f32.mrb[0].mxu0
    %v213 = vadd.f32 %v117, %v212
    %v214 = vpop.f32.mrb[0].mxu0
    %v215 = vadd.f32 %v121, %v214
    %v216 = vpop.f32.mrb[0].mxu0
    %v217 = vadd.f32 %v117, %v216
    %v218 = vpop.f32.mrb[0].mxu0
    %v219 = vadd.f32 %v121, %v218
    %220 = vdwg.mxu0
    %221 = vmatprep.subr.bf16.mxu0 %v161
    %222 = vmatpush1.bf16.msra.mxu0 %v160
    %223 = vmatprep.subr.bf16.mxu0 %v165
    %224 = vmatpush1.bf16.msra.mxu0 %v164
    %225 = vmatprep.subr.bf16.mxu0 0
    %226 = vmatpush1.bf16.msra.mxu0 0
    %227 = vmatprep.subr.bf16.mxu0 0
    %228 = vmatpush1.bf16.msra.mxu0 0
    %229 = vmatprep.subr.bf16.mxu0 0
    %230 = vmatpush1.bf16.msra.mxu0 0
    %231 = vmatprep.subr.bf16.mxu0 0
    %232 = vmatpush1.bf16.msra.mxu0 0
    %233 = vmatprep.subr.bf16.mxu0 0
    %234 = vmatpush1.bf16.msra.mxu0 0
    %235 = vmatprep.subr.bf16.mxu0 0
    %236 = vmatpush1.bf16.msra.mxu0 0
    %237 = vmatprep.subr.bf16.mxu0 0
    %238 = vmatpush1.bf16.msra.mxu0 0
    %239 = vmatprep.subr.bf16.mxu0 0
    %240 = vmatpush1.bf16.msra.mxu0 0
    %241 = vmatprep.subr.bf16.mxu0 0
    %242 = vmatpush1.bf16.msra.mxu0 0
    %243 = vmatprep.subr.bf16.mxu0 0
    %244 = vmatpush1.bf16.msra.mxu0 0
    %245 = vmatprep.subr.bf16.mxu0 0
    %246 = vmatpush1.bf16.msra.mxu0 0
    %247 = vmatprep.subr.bf16.mxu0 0
    %248 = vmatpush1.bf16.msra.mxu0 0
    %249 = vmatprep.subr.bf16.mxu0 0
    %250 = vmatpush1.bf16.msra.mxu0 0
    %251 = vmatprep.subr.bf16.mxu0 0
    %252 = vmatpush1.bf16.msra.mxu0 0
    %253 = vmatprep.mubr.bf16.mxu0 0
    %254 = vmatmul.mubr.bf16.gmra.mrb[0].mxu0 %v176
    %v255 = vpop.f32.mrb[0].mxu0
    %v256 = vadd.f32 %v125, %v255
    %v257 = vpop.f32.mrb[0].mxu0
    %v258 = vadd.f32 %v129, %v257
    %v259 = vpop.f32.mrb[0].mxu0
    %v260 = vadd.f32 %v125, %v259
    %v261 = vpop.f32.mrb[0].mxu0
    %v262 = vadd.f32 %v129, %v261
    %263 = vdwg.mxu0
    %v264 = vmax.f32 %v213, 0.0
    %v265 = vmax.f32 %v215, 0.0
    %v266 = vmax.f32 %v256, 0.0
    %v267 = vmax.f32 %v258, 0.0
    %v268 = vmax.f32 %v217, 0.0
    %v269 = vmax.f32 %v219, 0.0
    %v270 = vmax.f32 %v260, 0.0
    %v271 = vmax.f32 %v262, 0.0
    %v272 = vpack.c.bf16 %v268, %v264
    %v273 = vpack.c.bf16 %v269, %v265
    %v274 = vpack.c.bf16 %v270, %v266
    %v275 = vpack.c.bf16 %v271, %v267
    %v276 = vld [vmem:[#allocation6] sm:$0xf]
    %v277 = vld [vmem:[#allocation6 + $0x4] sm:$0xf]
    %v278 = vld [vmem:[#allocation6 + $0x8] sm:$0xf]
    %v279 = vld [vmem:[#allocation6 + $0xc] sm:$0xf]
    %v280 = vld [vmem:[#allocation6 + $0x10] sm:$0xf]
    %v281 = vld [vmem:[#allocation6 + $0x14] sm:$0xf]
    %v282 = vld [vmem:[#allocation6 + $0x18] sm:$0xf]
    %v283 = vld [vmem:[#allocation6 + $0x1c] sm:$0xf]
    %v284 = vld [vmem:[#allocation6 + $0x20] sm:$0xf]
    %v285 = vld [vmem:[#allocation6 + $0x24] sm:$0xf]
    %v286 = vld [vmem:[#allocation6 + $0x28] sm:$0xf]
    %v287 = vld [vmem:[#allocation6 + $0x2c] sm:$0xf]
    %v288 = vld [vmem:[#allocation6 + $0x30] sm:$0xf]
    %v289 = vld [vmem:[#allocation6 + $0x34] sm:$0xf]
    %v290 = vld [vmem:[#allocation6 + $0x38] sm:$0xf]
    %v291 = vld [vmem:[#allocation6 + $0x3c] sm:$0xf]
    %v292 = vld [vmem:[#allocation6 + $0x40] sm:$0xf]
    %v293 = vld [vmem:[#allocation6 + $0x44] sm:$0xf]
    %v294 = vld [vmem:[#allocation6 + $0x48] sm:$0xf]
    %v295 = vld [vmem:[#allocation6 + $0x4c] sm:$0xf]
    %v296 = vld [vmem:[#allocation6 + $0x50] sm:$0xf]
    %v297 = vld [vmem:[#allocation6 + $0x54] sm:$0xf]
    %v298 = vld [vmem:[#allocation6 + $0x58] sm:$0xf]
    %v299 = vld [vmem:[#allocation6 + $0x5c] sm:$0xf]
    %v300 = vld [vmem:[#allocation6 + $0x60] sm:$0xf]
    %v301 = vld [vmem:[#allocation6 + $0x64] sm:$0xf]
    %v302 = vld [vmem:[#allocation6 + $0x68] sm:$0xf]
    %v303 = vld [vmem:[#allocation6 + $0x6c] sm:$0xf]
    %v304 = vld [vmem:[#allocation6 + $0x70] sm:$0xf]
    %v305 = vld [vmem:[#allocation6 + $0x74] sm:$0xf]
    %v306 = vld [vmem:[#allocation6 + $0x78] sm:$0xf]
    %v307 = vld [vmem:[#allocation6 + $0x7c] sm:$0xf]
    %v308 = vld [vmem:[#allocation6 + $0x80] sm:$0xf]
    %v309 = vld [vmem:[#allocation6 + $0x84] sm:$0xf]
    %v310 = vld [vmem:[#allocation6 + $0x88] sm:$0xf]
    %v311 = vld [vmem:[#allocation6 + $0x8c] sm:$0xf]
    %v312 = vld [vmem:[#allocation6 + $0x90] sm:$0xf]
    %v313 = vld [vmem:[#allocation6 + $0x94] sm:$0xf]
    %v314 = vld [vmem:[#allocation6 + $0x98] sm:$0xf]
    %v315 = vld [vmem:[#allocation6 + $0x9c] sm:$0xf]
    %v316 = vld [vmem:[#allocation6 + $0xa0] sm:$0xf]
    %v317 = vld [vmem:[#allocation6 + $0xa4] sm:$0xf]
    %v318 = vld [vmem:[#allocation6 + $0xa8] sm:$0xf]
    %v319 = vld [vmem:[#allocation6 + $0xac] sm:$0xf]
    %v320 = vld [vmem:[#allocation6 + $0xb0] sm:$0xf]
    %v321 = vld [vmem:[#allocation6 + $0xb4] sm:$0xf]
    %v322 = vld [vmem:[#allocation6 + $0xb8] sm:$0xf]
    %v323 = vld [vmem:[#allocation6 + $0xbc] sm:$0xf]
    %v324 = vld [vmem:[#allocation6 + $0xc0] sm:$0xf]
    %v325 = vld [vmem:[#allocation6 + $0xc4] sm:$0xf]
    %v326 = vld [vmem:[#allocation6 + $0xc8] sm:$0xf]
    %v327 = vld [vmem:[#allocation6 + $0xcc] sm:$0xf]
    %v328 = vld [vmem:[#allocation6 + $0xd0] sm:$0xf]
    %v329 = vld [vmem:[#allocation6 + $0xd4] sm:$0xf]
    %v330 = vld [vmem:[#allocation6 + $0xd8] sm:$0xf]
    %v331 = vld [vmem:[#allocation6 + $0xdc] sm:$0xf]
    %v332 = vld [vmem:[#allocation6 + $0xe0] sm:$0xf]
    %v333 = vld [vmem:[#allocation6 + $0xe4] sm:$0xf]
    %v334 = vld [vmem:[#allocation6 + $0xe8] sm:$0xf]
    %v335 = vld [vmem:[#allocation6 + $0xec] sm:$0xf]
    %v336 = vld [vmem:[#allocation6 + $0xf0] sm:$0xf]
    %v337 = vld [vmem:[#allocation6 + $0xf4] sm:$0xf]
    %v338 = vld [vmem:[#allocation6 + $0xf8] sm:$0xf]
    %v339 = vld [vmem:[#allocation6 + $0xfc] sm:$0xf]
    %v340 = vld [vmem:[%s4] sm:$0x1]
    %v342 = vlaneseq
    %v343 = vshrl.u32 %v342, 7
    %v344 = vsub.s32 0, %v343
    %v345 = vrot.slane %v340, %v344
    %v411 = vunpack.c.l.b16 %v276
    %v412 = vunpack.c.l.b16 %v277
    %v413 = vunpack.c.l.b16 %v278
    %v414 = vunpack.c.l.b16 %v279
    %v415 = vunpack.c.l.b16 %v280
    %v416 = vunpack.c.l.b16 %v281
    %v417 = vunpack.c.l.b16 %v282
    %v418 = vunpack.c.l.b16 %v283
    %v419 = vunpack.c.l.b16 %v284
    %v420 = vunpack.c.l.b16 %v285
    %v421 = vunpack.c.l.b16 %v286
    %v422 = vunpack.c.l.b16 %v287
    %v423 = vunpack.c.l.b16 %v288
    %v424 = vunpack.c.l.b16 %v289
    %v425 = vunpack.c.l.b16 %v290
    %v426 = vunpack.c.l.b16 %v291
    %v427 = vunpack.c.l.b16 %v292
    %v428 = vunpack.c.l.b16 %v293
    %v429 = vunpack.c.l.b16 %v294
    %v430 = vunpack.c.l.b16 %v295
    %v431 = vunpack.c.l.b16 %v296
    %v432 = vunpack.c.l.b16 %v297
    %v433 = vunpack.c.l.b16 %v298
    %v434 = vunpack.c.l.b16 %v299
    %v435 = vunpack.c.l.b16 %v300
    %v436 = vunpack.c.l.b16 %v301
    %v437 = vunpack.c.l.b16 %v302
    %v438 = vunpack.c.l.b16 %v303
    %v439 = vunpack.c.l.b16 %v304
    %v440 = vunpack.c.l.b16 %v305
    %v441 = vunpack.c.l.b16 %v306
    %v442 = vunpack.c.l.b16 %v307
    %v443 = vunpack.c.l.b16 %v308
    %v444 = vunpack.c.l.b16 %v309
    %v445 = vunpack.c.l.b16 %v310
    %v446 = vunpack.c.l.b16 %v311
    %v447 = vunpack.c.l.b16 %v312
    %v448 = vunpack.c.l.b16 %v313
    %v449 = vunpack.c.l.b16 %v314
    %v450 = vunpack.c.l.b16 %v315
    %v451 = vunpack.c.l.b16 %v316
    %v452 = vunpack.c.l.b16 %v317
    %v453 = vunpack.c.l.b16 %v318
    %v454 = vunpack.c.l.b16 %v319
    %v455 = vunpack.c.l.b16 %v320
    %v456 = vunpack.c.l.b16 %v321
    %v457 = vunpack.c.l.b16 %v322
    %v458 = vunpack.c.l.b16 %v323
    %v459 = vunpack.c.l.b16 %v324
    %v460 = vunpack.c.l.b16 %v325
    %v461 = vunpack.c.l.b16 %v326
    %v462 = vunpack.c.l.b16 %v327
    %v463 = vunpack.c.l.b16 %v328
    %v464 = vunpack.c.l.b16 %v329
    %v465 = vunpack.c.l.b16 %v330
    %v466 = vunpack.c.l.b16 %v331
    %v467 = vunpack.c.l.b16 %v332
    %v468 = vunpack.c.l.b16 %v333
    %v469 = vunpack.c.l.b16 %v334
    %v470 = vunpack.c.l.b16 %v335
    %v471 = vunpack.c.l.b16 %v336
    %v472 = vunpack.c.l.b16 %v337
    %v473 = vunpack.c.l.b16 %v338
    %v474 = vunpack.c.l.b16 %v339
    %v475 = vpack.c.b16 %v412, %v411
    %v476 = vpack.c.b16 %v414, %v413
    %v477 = vpack.c.b16 %v416, %v415
    %v478 = vpack.c.b16 %v418, %v417
    %v479 = vpack.c.b16 %v420, %v419
    %v480 = vpack.c.b16 %v422, %v421
    %v481 = vpack.c.b16 %v424, %v423
    %v482 = vpack.c.b16 %v426, %v425
    %v483 = vpack.c.b16 %v428, %v427
    %v484 = vpack.c.b16 %v430, %v429
    %v485 = vpack.c.b16 %v432, %v431
    %v486 = vpack.c.b16 %v434, %v433
    %v487 = vpack.c.b16 %v436, %v435
    %v488 = vpack.c.b16 %v438, %v437
    %v489 = vpack.c.b16 %v440, %v439
    %v490 = vpack.c.b16 %v442, %v441
    %v491 = vpack.c.b16 %v444, %v443
    %v492 = vpack.c.b16 %v446, %v445
    %v493 = vpack.c.b16 %v448, %v447
    %v494 = vpack.c.b16 %v450, %v449
    %v495 = vpack.c.b16 %v452, %v451
    %v496 = vpack.c.b16 %v454, %v453
    %v497 = vpack.c.b16 %v456, %v455
    %v498 = vpack.c.b16 %v458, %v457
    %v499 = vpack.c.b16 %v460, %v459
    %v500 = vpack.c.b16 %v462, %v461
    %v501 = vpack.c.b16 %v464, %v463
    %v502 = vpack.c.b16 %v466, %v465
    %v503 = vpack.c.b16 %v468, %v467
    %v504 = vpack.c.b16 %v470, %v469
    %v505 = vpack.c.b16 %v472, %v471
    %v506 = vpack.c.b16 %v474, %v473
    %539 = vmatprep.subr.bf16.mxu0 0
    %540 = vmatpush1.bf16.msra.mxu0 %v475
    %541 = vmatprep.subr.bf16.mxu0 0
    %542 = vmatpush1.bf16.msra.mxu0 %v476
    %543 = vmatprep.subr.bf16.mxu0 0
    %544 = vmatpush1.bf16.msra.mxu0 %v477
    %545 = vmatprep.subr.bf16.mxu0 0
    %546 = vmatpush1.bf16.msra.mxu0 %v478
    %547 = vmatprep.subr.bf16.mxu0 0
    %548 = vmatpush1.bf16.msra.mxu0 %v479
    %549 = vmatprep.subr.bf16.mxu0 0
    %550 = vmatpush1.bf16.msra.mxu0 %v480
    %551 = vmatprep.subr.bf16.mxu0 0
    %552 = vmatpush1.bf16.msra.mxu0 %v481
    %553 = vmatprep.subr.bf16.mxu0 0
    %554 = vmatpush1.bf16.msra.mxu0 %v482
    %555 = vmatprep.subr.bf16.mxu0 0
    %556 = vmatpush1.bf16.msra.mxu0 %v483
    %557 = vmatprep.subr.bf16.mxu0 0
    %558 = vmatpush1.bf16.msra.mxu0 %v484
    %559 = vmatprep.subr.bf16.mxu0 0
    %560 = vmatpush1.bf16.msra.mxu0 %v485
    %561 = vmatprep.subr.bf16.mxu0 0
    %562 = vmatpush1.bf16.msra.mxu0 %v486
    %563 = vmatprep.subr.bf16.mxu0 0
    %564 = vmatpush1.bf16.msra.mxu0 %v487
    %565 = vmatprep.subr.bf16.mxu0 0
    %566 = vmatpush1.bf16.msra.mxu0 %v488
    %567 = vmatprep.subr.bf16.mxu0 0
    %568 = vmatpush1.bf16.msra.mxu0 %v489
    %569 = vmatprep.subr.bf16.mxu0 0
    %570 = vmatpush1.bf16.msra.mxu0 %v490
    %571 = vmatprep.mubr.bf16.mxu0 %v273
    %572 = vmatmul.mubr.bf16.gmra.mrb[0].mxu0 %v272
    %v573 = vpop.f32.mrb[0].mxu0
    %v574 = vadd.f32 %v345, %v573
    %v575 = vpop.f32.mrb[0].mxu0
    %v576 = vpop.f32.mrb[0].mxu0
    %v577 = vadd.f32 %v345, %v576
    %v578 = vpop.f32.mrb[0].mxu0
    %579 = vdwg.mxu0
    %580 = vmatprep.subr.bf16.mxu0 0
    %581 = vmatpush1.bf16.msra.mxu0 %v491
    %582 = vmatprep.subr.bf16.mxu0 0
    %583 = vmatpush1.bf16.msra.mxu0 %v492
    %584 = vmatprep.subr.bf16.mxu0 0
    %585 = vmatpush1.bf16.msra.mxu0 %v493
    %586 = vmatprep.subr.bf16.mxu0 0
    %587 = vmatpush1.bf16.msra.mxu0 %v494
    %588 = vmatprep.subr.bf16.mxu0 0
    %589 = vmatpush1.bf16.msra.mxu0 %v495
    %590 = vmatprep.subr.bf16.mxu0 0
    %591 = vmatpush1.bf16.msra.mxu0 %v496
    %592 = vmatprep.subr.bf16.mxu0 0
    %593 = vmatpush1.bf16.msra.mxu0 %v497
    %594 = vmatprep.subr.bf16.mxu0 0
    %595 = vmatpush1.bf16.msra.mxu0 %v498
    %596 = vmatprep.subr.bf16.mxu0 0
    %597 = vmatpush1.bf16.msra.mxu0 %v499
    %598 = vmatprep.subr.bf16.mxu0 0
    %599 = vmatpush1.bf16.msra.mxu0 %v500
    %600 = vmatprep.subr.bf16.mxu0 0
    %601 = vmatpush1.bf16.msra.mxu0 %v501
    %602 = vmatprep.subr.bf16.mxu0 0
    %603 = vmatpush1.bf16.msra.mxu0 %v502
    %604 = vmatprep.subr.bf16.mxu0 0
    %605 = vmatpush1.bf16.msra.mxu0 %v503
    %606 = vmatprep.subr.bf16.mxu0 0
    %607 = vmatpush1.bf16.msra.mxu0 %v504
    %608 = vmatprep.subr.bf16.mxu0 0
    %609 = vmatpush1.bf16.msra.mxu0 %v505
    %610 = vmatprep.subr.bf16.mxu0 0
    %611 = vmatpush1.bf16.msra.mxu0 %v506
    %612 = vmatprep.mubr.bf16.mxu0 %v275
    %613 = vmatmul.mubr.bf16.gmra.mrb[0].mxu0 %v274
    %v614 = vpop.f32.mrb[0].mxu0
    %v615 = vadd.f32 %v574, %v614
    %v616 = vpop.f32.mrb[0].mxu0
    %v617 = vpop.f32.mrb[0].mxu0
    %v618 = vadd.f32 %v577, %v617
    %v619 = vpop.f32.mrb[0].mxu0
    %620 = vdwg.mxu0
    %v621 = vmax.f32 %v615, 0.0
    %v622 = vmax.f32 %v618, 0.0
    %v623 = vpack.c.bf16 %v622, %v621
    %v624 = vld [vmem:[#allocation7] sm:$0xf]
    %v625 = vld [vmem:[#allocation7 + $0x4] sm:$0xf]
    %v626 = vld [vmem:[#allocation7 + $0x8] sm:$0xf]
    %v627 = vld [vmem:[#allocation7 + $0xc] sm:$0xf]
    %v628 = vld [vmem:[#allocation7 + $0x10] sm:$0xf]
    %v629 = vld [vmem:[#allocation7 + $0x14] sm:$0xf]
    %v630 = vld [vmem:[#allocation7 + $0x18] sm:$0xf]
    %v631 = vld [vmem:[#allocation7 + $0x1c] sm:$0xf]
    %v632 = vld [vmem:[#allocation7 + $0x20] sm:$0xf]
    %v633 = vld [vmem:[#allocation7 + $0x24] sm:$0xf]
    %v634 = vld [vmem:[#allocation7 + $0x28] sm:$0xf]
    %v635 = vld [vmem:[#allocation7 + $0x2c] sm:$0xf]
    %v636 = vld [vmem:[#allocation7 + $0x30] sm:$0xf]
    %v637 = vld [vmem:[#allocation7 + $0x34] sm:$0xf]
    %v638 = vld [vmem:[#allocation7 + $0x38] sm:$0xf]
    %v639 = vld [vmem:[#allocation7 + $0x3c] sm:$0xf]
    %v640 = vld [vmem:[%s6] sm:$0x1]
    %v642 = vlaneseq
    %v643 = vshrl.u32 %v642, 7
    %v644 = vsub.s32 0, %v643
    %v645 = vrot.slane %v640, %v644
    %v663 = vunpack.c.l.b16 %v624
    %v664 = vunpack.c.l.b16 %v625
    %v665 = vunpack.c.l.b16 %v626
    %v666 = vunpack.c.l.b16 %v627
    %v667 = vunpack.c.l.b16 %v628
    %v668 = vunpack.c.l.b16 %v629
    %v669 = vunpack.c.l.b16 %v630
    %v670 = vunpack.c.l.b16 %v631
    %v671 = vunpack.c.l.b16 %v632
    %v672 = vunpack.c.l.b16 %v633
    %v673 = vunpack.c.l.b16 %v634
    %v674 = vunpack.c.l.b16 %v635
    %v675 = vunpack.c.l.b16 %v636
    %v676 = vunpack.c.l.b16 %v637
    %v677 = vunpack.c.l.b16 %v638
    %v678 = vunpack.c.l.b16 %v639
    %v679 = vpack.c.b16 %v664, %v663
    %v680 = vpack.c.b16 %v666, %v665
    %v681 = vpack.c.b16 %v668, %v667
    %v682 = vpack.c.b16 %v670, %v669
    %v683 = vpack.c.b16 %v672, %v671
    %v684 = vpack.c.b16 %v674, %v673
    %v685 = vpack.c.b16 %v676, %v675
    %v686 = vpack.c.b16 %v678, %v677
    %695 = vmatprep.subr.bf16.mxu0 0
    %696 = vmatpush1.bf16.msra.mxu0 %v679
    %697 = vmatprep.subr.bf16.mxu0 0
    %698 = vmatpush1.bf16.msra.mxu0 %v680
    %699 = vmatprep.subr.bf16.mxu0 0
    %700 = vmatpush1.bf16.msra.mxu0 %v681
    %701 = vmatprep.subr.bf16.mxu0 0
    %702 = vmatpush1.bf16.msra.mxu0 %v682
    %703 = vmatprep.subr.bf16.mxu0 0
    %704 = vmatpush1.bf16.msra.mxu0 %v683
    %705 = vmatprep.subr.bf16.mxu0 0
    %706 = vmatpush1.bf16.msra.mxu0 %v684
    %707 = vmatprep.subr.bf16.mxu0 0
    %708 = vmatpush1.bf16.msra.mxu0 %v685
    %709 = vmatprep.subr.bf16.mxu0 0
    %710 = vmatpush1.bf16.msra.mxu0 %v686
    %711 = vmatprep.subr.bf16.mxu0 0
    %712 = vmatpush1.bf16.msra.mxu0 0
    %713 = vmatprep.subr.bf16.mxu0 0
    %714 = vmatpush1.bf16.msra.mxu0 0
    %715 = vmatprep.subr.bf16.mxu0 0
    %716 = vmatpush1.bf16.msra.mxu0 0
    %717 = vmatprep.subr.bf16.mxu0 0
    %718 = vmatpush1.bf16.msra.mxu0 0
    %719 = vmatprep.subr.bf16.mxu0 0
    %720 = vmatpush1.bf16.msra.mxu0 0
    %721 = vmatprep.subr.bf16.mxu0 0
    %722 = vmatpush1.bf16.msra.mxu0 0
    %723 = vmatprep.subr.bf16.mxu0 0
    %724 = vmatpush1.bf16.msra.mxu0 0
    %725 = vmatprep.subr.bf16.mxu0 0
    %726 = vmatpush1.bf16.msra.mxu0 0
    %727 = vmatprep.mubr.bf16.mxu0 0
    %728 = vmatmul.mubr.bf16.gmra.mrb[0].mxu0 %v623
    %v729 = vpop.f32.mrb[0].mxu0
    %v730 = vadd.f32 %v645, %v729
    %v731 = vpop.f32.mrb[0].mxu0
    %v732 = vpop.f32.mrb[0].mxu0
    %v733 = vadd.f32 %v645, %v732
    %v734 = vpop.f32.mrb[0].mxu0
    %735 = vdwg.mxu0
    %v736 = vmax.f32 %v730, 0.0
    %v737 = vmax.f32 %v733, 0.0
    %v738 = vpack.c.bf16 %v737, %v736
    %v739 = vld [vmem:[#allocation9] sm:$0xf]
    %v740 = vld [vmem:[#allocation9 + $0x4] sm:$0xf]
    %v741 = vld [vmem:[#allocation9 + $0x8] sm:$0xf]
    %v742 = vld [vmem:[#allocation9 + $0xc] sm:$0xf]
    %v743 = vld [vmem:[#allocation9 + $0x10] sm:$0xf]
    %v744 = vld [vmem:[#allocation9 + $0x14] sm:$0xf]
    %v745 = vld [vmem:[#allocation9 + $0x18] sm:$0xf]
    %v746 = vld [vmem:[#allocation9 + $0x1c] sm:$0xf]
    %v747 = vld [vmem:[#allocation9 + $0x20] sm:$0xf]
    %v748 = vld [vmem:[#allocation9 + $0x24] sm:$0xf]
    %v749 = vld [vmem:[#allocation9 + $0x28] sm:$0xf]
    %v750 = vld [vmem:[#allocation9 + $0x2c] sm:$0xf]
    %v751 = vld [vmem:[#allocation9 + $0x30] sm:$0xf]
    %v752 = vld [vmem:[#allocation9 + $0x34] sm:$0xf]
    %v753 = vld [vmem:[#allocation9 + $0x38] sm:$0xf]
    %v754 = vld [vmem:[#allocation9 + $0x3c] sm:$0xf]
    %v755 = vld [vmem:[%s8] sm:$0x1]
    %v757 = vlaneseq
    %v758 = vshrl.u32 %v757, 7
    %v759 = vsub.s32 0, %v758
    %v760 = vrot.slane %v755, %v759
    %v778 = vunpack.c.l.b16 %v739
    %v779 = vunpack.c.l.b16 %v740
    %v780 = vunpack.c.l.b16 %v741
    %v781 = vunpack.c.l.b16 %v742
    %v782 = vunpack.c.l.b16 %v743
    %v783 = vunpack.c.l.b16 %v744
    %v784 = vunpack.c.l.b16 %v745
    %v785 = vunpack.c.l.b16 %v746
    %v786 = vunpack.c.l.b16 %v747
    %v787 = vunpack.c.l.b16 %v748
    %v788 = vunpack.c.l.b16 %v749
    %v789 = vunpack.c.l.b16 %v750
    %v790 = vunpack.c.l.b16 %v751
    %v791 = vunpack.c.l.b16 %v752
    %v792 = vunpack.c.l.b16 %v753
    %v793 = vunpack.c.l.b16 %v754
    %v794 = vpack.c.b16 %v779, %v778
    %v795 = vpack.c.b16 %v781, %v780
    %v796 = vpack.c.b16 %v783, %v782
    %v797 = vpack.c.b16 %v785, %v784
    %v798 = vpack.c.b16 %v787, %v786
    %v799 = vpack.c.b16 %v789, %v788
    %v800 = vpack.c.b16 %v791, %v790
    %v801 = vpack.c.b16 %v793, %v792
    %810 = vmatprep.subr.bf16.mxu0 0
    %811 = vmatpush1.bf16.msra.mxu0 %v794
    %812 = vmatprep.subr.bf16.mxu0 0
    %813 = vmatpush1.bf16.msra.mxu0 %v795
    %814 = vmatprep.subr.bf16.mxu0 0
    %815 = vmatpush1.bf16.msra.mxu0 %v796
    %816 = vmatprep.subr.bf16.mxu0 0
    %817 = vmatpush1.bf16.msra.mxu0 %v797
    %818 = vmatprep.subr.bf16.mxu0 0
    %819 = vmatpush1.bf16.msra.mxu0 %v798
    %820 = vmatprep.subr.bf16.mxu0 0
    %821 = vmatpush1.bf16.msra.mxu0 %v799
    %822 = vmatprep.subr.bf16.mxu0 0
    %823 = vmatpush1.bf16.msra.mxu0 %v800
    %824 = vmatprep.subr.bf16.mxu0 0
    %825 = vmatpush1.bf16.msra.mxu0 %v801
    %826 = vmatprep.subr.bf16.mxu0 0
    %827 = vmatpush1.bf16.msra.mxu0 0
    %828 = vmatprep.subr.bf16.mxu0 0
    %829 = vmatpush1.bf16.msra.mxu0 0
    %830 = vmatprep.subr.bf16.mxu0 0
    %831 = vmatpush1.bf16.msra.mxu0 0
    %832 = vmatprep.subr.bf16.mxu0 0
    %833 = vmatpush1.bf16.msra.mxu0 0
    %834 = vmatprep.subr.bf16.mxu0 0
    %835 = vmatpush1.bf16.msra.mxu0 0
    %836 = vmatprep.subr.bf16.mxu0 0
    %837 = vmatpush1.bf16.msra.mxu0 0
    %838 = vmatprep.subr.bf16.mxu0 0
    %839 = vmatpush1.bf16.msra.mxu0 0
    %840 = vmatprep.subr.bf16.mxu0 0
    %841 = vmatpush1.bf16.msra.mxu0 0
    %842 = vmatprep.mubr.bf16.mxu0 0
    %843 = vmatmul.mubr.bf16.gmra.mrb[0].mxu0 %v738
    %v844 = vpop.f32.mrb[0].mxu0
    %v845 = vadd.f32 %v760, %v844
    %v846 = vpop.f32.mrb[0].mxu0
    %v847 = vpop.f32.mrb[0].mxu0
    %v848 = vadd.f32 %v760, %v847
    %v849 = vpop.f32.mrb[0].mxu0
    %850 = vdwg.mxu0
    %v851 = vpack.c.bf16 %v848, %v845
    %v853 = vunpack.c.l.b16 %v851
    %v854 = vunpack.c.h.b16 %v851
    %v855 = vpack.c.b16 %v853, %v853
    %v856 = vpack.c.b16 %v854, %v854
    %859 = vst [vmem:[%s9] sm:$0xf] %v855
    %860 = vst [vmem:[%s9 + $0x4] sm:$0xf] %v856
    // Predicated region
    $region58: #{neural_classifier_forward.1} parent=1 // pred_check
      _
    $region59: #{neural_classifier_forward.1} parent=1 // pred_check_branch
      %862 = sbr.rel (0) target = $region61
    $region60: #{neural_classifier_forward.1} parent=1 // pred_region
      _
    $region61: #{neural_classifier_forward.1} parent=1 // pred_fallthru
      _
    // Predicated region
    $region62: #{neural_classifier_forward.1} parent=1 // pred_check
      _
    $region63: #{neural_classifier_forward.1} parent=1 // pred_check_branch
      %864 = sbr.rel (0) target = $region65
    $region64: #{neural_classifier_forward.1} parent=1 // pred_region
      _
    $region65: #{neural_classifier_forward.1} parent=1 // pred_fallthru
      _
    %865 = vsyncpa [#allocation3], 1
    %866 = vsyncpa [#allocation5], 1
    %867 = vsyncpa [#allocation8], 1

</llo_original>
